<compile_context>
chip_gen: v5e
topology: v5e:2x2
jax: 0.10.0
libtpu: 0.0.40
codegen_flags: <defaults>
</compile_context>

<pallas_src>
import jax
import jax.numpy as jnp
from jax import lax
from jax.experimental import pallas as pl
from jax.experimental.pallas import tpu as pltpu


def _round_up(n, m):
    return ((n + m - 1) // m) * m


def _largest_divisor_leq(n, target):
    target = max(1, min(n, target))
    for d in range(target, 0, -1):
        if n % d == 0:
            return d
    return 1


def _vmem_limit_bytes():
    # ~3/4 of physical VMEM: 48 MiB on v7x (64 MiB), 96 MiB on v5e/v6e (128 MiB).
    # Falls back to the v7x-safe value if the query is unavailable (CPU /
    # interpret mode).
    try:
        cap = int(pltpu.get_tpu_info().vmem_capacity_bytes)
    except Exception:
        cap = 64 * 1024 * 1024
    return cap * 3 // 4


def _choose_b_tile(n, c):
    # Packing a few batch elements per grid step only amortizes the ~0.35us
    # per-step overhead (it does not fill MXU rows/cols), so keep it modest and
    # always leave a parallel grid axis of extent >= 2 (v7x has 2 TensorCores).
    if c >= 128:
        bt = 1
    else:
        bt = _largest_divisor_leq(n, max(1, 128 // c))
    while bt > 1 and n // bt < 2:
        bt = _largest_divisor_leq(n, bt - 1)
    return bt


def _choose_hw_tile(hw, b_tile, c, x_itemsize, vmem_limit):
    # Size the streamed HW tile from what is left after the resident (C, C)
    # blocks, using VMEM-padded shapes (sublane 8 / lane 128).
    c_sub = _round_up(c, 8)
    c_lane = _round_up(c, 128)
    acc_bytes = b_tile * c_sub * c_lane * 4             # f32 scratch accumulator
    att_bytes = b_tile * c_sub * c_lane * x_itemsize    # attention block (x dtype)
    resident1 = acc_bytes + 2 * att_bytes               # pass 1: scratch + out bufs
    resident2 = 2 * att_bytes                           # pass 2: attention in bufs
    stream1 = 2 * b_tile * c_sub * x_itemsize           # pass 1: x (double-buffered)
    stream2 = 4 * b_tile * c_sub * x_itemsize           # pass 2: x in + out
    budget = int(vmem_limit * 0.85)                     # headroom for Mosaic scratch
    hw_max = min((budget - resident1) // max(1, stream1),
                 (budget - resident2) // max(1, stream2))
    hw_tile = max(128, (hw_max // 128) * 128)
    return min(hw_tile, _round_up(hw, 128))


def cam_attention_kernel(x_ref, att_ref, acc_ref):
    """Grid (batch_tiles, hw_tiles); acc/att blocks are resident across hw tiles."""
    t = pl.program_id(1)

    @pl.when(t == 0)
    def _():
        acc_ref[...] = jnp.zeros_like(acc_ref)

    # Partial energy for this HW tile: contract the spatial (last) axis of the
    # tile against itself -> (b, C, C).  One streamed operand; the per-tile
    # transpose rides the XLU (idle while the MXU runs).  Operands stay in the
    # input dtype; accumulation is f32.
    x_t = x_ref[...]
    acc_ref[...] += lax.dot_general(
        x_t, x_t,
        dimension_numbers=(((2,), (2,)), ((0,), (0,))),
        preferred_element_type=jnp.float32)

    @pl.when(t == pl.num_programs(1) - 1)
    def _():
        energy = acc_ref[...]
        # softmax(rowmax(E) - E) == exp(rowmin(E) - E) / sum(exp(rowmin(E) - E)):
        # a single cross-lane row reduction instead of rowmax + a second shift.
        # Exact divide (attention rows sum to 1 to f32 precision).
        e_exp = jnp.exp(jnp.min(energy, axis=-1, keepdims=True) - energy)
        denom = jnp.sum(e_exp, axis=-1, keepdims=True)
        att_ref[...] = (e_exp / denom).astype(att_ref.dtype)


def cam_apply_kernel(gamma_ref, att_ref, x_ref, o_ref):
    """Grid (batch_tiles, hw_tiles); out tile = gamma * att @ x_tile + x_tile."""
    x_t = x_ref[...]
    out = jnp.einsum('bck,bkl->bcl', att_ref[...], x_t,
                     preferred_element_type=jnp.float32)
    gamma = gamma_ref[0]
    # Single cast path: scale in f32, cast once, add the residual in its dtype.
    o_ref[...] = (gamma * out).astype(o_ref.dtype) + x_t


def cam_forward(x, gamma):
    """x: (N, C, H, W), gamma: (1,) -> (N, C, H, W)."""
    N, C, H, W = x.shape
    HW = H * W

    vmem_limit = _vmem_limit_bytes()
    b_tile = _choose_b_tile(N, C)
    hw_tile = _choose_hw_tile(HW, b_tile, C, x.dtype.itemsize, vmem_limit)

    # Pad the flattened spatial axis to a multiple of hw_tile (>= 128) so
    # loads/stores are lane-dense.  Zero padding is exact: padded columns add
    # nothing to the energy and the residual on padded columns is discarded.
    HW_p = _round_up(HW, hw_tile)
    x_flat = x.reshape(N, C, HW)
    if HW_p != HW:
        x_flat = jnp.pad(x_flat, ((0, 0), (0, 0), (0, HW_p - HW)))

    n_b = N // b_tile
    n_t = HW_p // hw_tile
    gamma = gamma.reshape(1).astype(jnp.float32)

    # TODO(synk): for very large C (>~1k) add a C-row tile axis so the resident
    # (C, C) accumulator fits v7x's 64 MiB VMEM and provides extra parallelism.

    # Pass 1: attention (N, C, C) in the input dtype; f32 VMEM accumulator.
    attention = pl.pallas_call(
        cam_attention_kernel,
        out_shape=jax.ShapeDtypeStruct((N, C, C), x.dtype),
        grid_spec=pltpu.PrefetchScalarGridSpec(
            num_scalar_prefetch=0,
            grid=(n_b, n_t),
            in_specs=[
                pl.BlockSpec((b_tile, C, hw_tile), lambda b, t: (b, 0, t)),
            ],
            out_specs=pl.BlockSpec((b_tile, C, C), lambda b, t: (b, 0, 0)),
            scratch_shapes=[pltpu.VMEM((b_tile, C, C), jnp.float32)],
        ),
        compiler_params=pltpu.CompilerParams(
            dimension_semantics=("parallel", "arbitrary"),
            vmem_limit_bytes=vmem_limit),
    )(x_flat)

    # Pass 2: out = gamma * attention @ X + X, streamed per HW tile.
    out_flat = pl.pallas_call(
        cam_apply_kernel,
        out_shape=jax.ShapeDtypeStruct((N, C, HW_p), x.dtype),
        grid_spec=pltpu.PrefetchScalarGridSpec(
            num_scalar_prefetch=0,
            grid=(n_b, n_t),
            in_specs=[
                pl.BlockSpec(memory_space=pltpu.SMEM),                 # gamma
                pl.BlockSpec((b_tile, C, C), lambda b, t: (b, 0, 0)),  # attention
                pl.BlockSpec((b_tile, C, hw_tile), lambda b, t: (b, 0, t)),
            ],
            out_specs=pl.BlockSpec((b_tile, C, hw_tile), lambda b, t: (b, 0, t)),
        ),
        compiler_params=pltpu.CompilerParams(
            dimension_semantics=("parallel", "parallel"),
            vmem_limit_bytes=vmem_limit),
    )(gamma, attention, x_flat)

    if HW_p != HW:
        out_flat = out_flat[:, :, :HW]
    return out_flat.reshape(N, C, H, W)


def cam_reference(x, gamma):
    N, C, H, W = x.shape
    q = x.reshape(N, C, -1)                               # (N, C, HW)
    k = jnp.transpose(q, (0, 2, 1))                       # (N, HW, C)
    energy = jnp.einsum('ncl,nlk->nck', q, k)             # (N, C, C)
    e_new = jnp.max(energy, axis=-1, keepdims=True) - energy
    att = jax.nn.softmax(e_new, axis=-1)
    out = jnp.einsum('nck,nkl->ncl', att, q).reshape(N, C, H, W)
    return gamma[0] * out + x


if __name__ == "__main__":
    key = jax.random.PRNGKey(0)
    N, C, H, W = 2, 8, 16, 16
    x = jax.random.normal(key, (N, C, H, W), dtype=jnp.float32)

    # nn.Parameter(torch.zeros(1)) in __init__; use a deterministic nonzero
    # value so the attention path actually contributes to the output.
    gamma = jnp.array([0.5], dtype=jnp.float32)

    out = jax.block_until_ready(cam_forward(x, gamma))
    ref = cam_reference(x, gamma)

    assert out.shape == (N, C, H, W)
    err = float(jnp.max(jnp.abs(out - ref)))
    assert jnp.allclose(out, ref, atol=2e-3, rtol=2e-3), f"max abs err={err}"

    print("KERNEL_OK")
</pallas_src>

<mosaic_0001>
module attributes {stable_mosaic.version = 11 : i64} {
  func.func @cam_attention_kernel(%arg0: i32, %arg1: i32, %arg2: memref<1x8x256xf32, #tpu.memory_space<vmem>>, %arg3: memref<1x8x8xf32, #tpu.memory_space<vmem>>, %arg4: memref<1x8x8xf32, #tpu.memory_space<vmem>>) attributes {dimension_semantics = [#tpu.dimension_semantics<parallel>, #tpu.dimension_semantics<arbitrary>], iteration_bounds = array<i64: 2, 1>, scalar_prefetch = 0 : i64, scratch_operands = 1 : i64, tpu.core_type = #tpu.core_type<tc>, window_params = [{transform_indices = @transform_0, window_bounds = array<i64: 1, 8, 256>}, {transform_indices = @transform_1, window_bounds = array<i64: 1, 8, 8>}]} {
    %c0_i32 = arith.constant 0 : i32
    %0 = arith.cmpi eq, %arg1, %c0_i32 : i32
    %1 = arith.extui %0 : i1 to i32
    %c0_i32_0 = arith.constant 0 : i32
    %2 = arith.cmpi ne, %1, %c0_i32_0 : i32
    scf.if %2 {
      %cst_11 = arith.constant 0.000000e+00 : f32
      %11 = vector.broadcast %cst_11 : f32 to vector<1x8x8xf32>
      %c0_12 = arith.constant 0 : index
      %c0_13 = arith.constant 0 : index
      %c0_14 = arith.constant 0 : index
      %12 = vector.load %arg4[%c0_12, %c0_13, %c0_14] : memref<1x8x8xf32, #tpu.memory_space<vmem>>, vector<1x8x8xf32>
      tpu.vector_store %arg4[%c0_12, %c0_13, %c0_14], %11 {strides = array<i32>} : memref<1x8x8xf32, #tpu.memory_space<vmem>>, vector<1x8x8xf32>,
    } else {
    }
    %c0 = arith.constant 0 : index
    %c0_1 = arith.constant 0 : index
    %c0_2 = arith.constant 0 : index
    %3 = vector.load %arg2[%c0, %c0_1, %c0_2] : memref<1x8x256xf32, #tpu.memory_space<vmem>>, vector<1x8x256xf32>
    %c0_3 = arith.constant 0 : index
    %c0_4 = arith.constant 0 : index
    %c0_5 = arith.constant 0 : index
    %4 = vector.load %arg4[%c0_3, %c0_4, %c0_5] : memref<1x8x8xf32, #tpu.memory_space<vmem>>, vector<1x8x8xf32>
    %cst = arith.constant dense<0.000000e+00> : vector<1x8x8xf32>
    %5 = tpu.matmul %3, %3, %cst {dimension_numbers = #tpu.dot_dimension_numbers<[2], [2], [1], [1], [0, 0, 0, 1, 1, 1], [0], [0]>} : vector<1x8x256xf32>, vector<1x8x256xf32>, vector<1x8x8xf32> -> vector<1x8x8xf32>
    %6 = arith.addf %4, %5 : vector<1x8x8xf32>
    %c0_6 = arith.constant 0 : index
    %c0_7 = arith.constant 0 : index
    %c0_8 = arith.constant 0 : index
    %7 = vector.load %arg4[%c0_6, %c0_7, %c0_8] : memref<1x8x8xf32, #tpu.memory_space<vmem>>, vector<1x8x8xf32>
    tpu.vector_store %arg4[%c0_6, %c0_7, %c0_8], %6 {strides = array<i32>} : memref<1x8x8xf32, #tpu.memory_space<vmem>>, vector<1x8x8xf32>,
    %c0_i32_9 = arith.constant 0 : i32
    %8 = arith.cmpi eq, %arg1, %c0_i32_9 : i32
    %9 = arith.extui %8 : i1 to i32
    %c0_i32_10 = arith.constant 0 : i32
    %10 = arith.cmpi ne, %9, %c0_i32_10 : i32
    scf.if %10 {
      %c0_11 = arith.constant 0 : index
      %c0_12 = arith.constant 0 : index
      %c0_13 = arith.constant 0 : index
      %11 = vector.load %arg4[%c0_11, %c0_12, %c0_13] : memref<1x8x8xf32, #tpu.memory_space<vmem>>, vector<1x8x8xf32>
      %cst_14 = arith.constant dense<0x7F800000> : vector<1x8xf32>
      %12 = vector.multi_reduction <minimumf>, %11, %cst_14 [2] : vector<1x8x8xf32> to vector<1x8xf32>
      %13 = vector.shape_cast %12 : vector<1x8xf32> to vector<1x8x1xf32>
      %14 = vector.broadcast %13 : vector<1x8x1xf32> to vector<1x8x8xf32>
      %15 = arith.subf %14, %11 : vector<1x8x8xf32>
      %16 = math.exp %15 : vector<1x8x8xf32>
      %cst_15 = arith.constant dense<0.000000e+00> : vector<1x8xf32>
      %17 = vector.multi_reduction <add>, %16, %cst_15 [2] : vector<1x8x8xf32> to vector<1x8xf32>
      %18 = vector.shape_cast %17 : vector<1x8xf32> to vector<1x8x1xf32>
      %19 = vector.broadcast %18 : vector<1x8x1xf32> to vector<1x8x8xf32>
      %20 = arith.divf %16, %19 : vector<1x8x8xf32>
      %c0_16 = arith.constant 0 : index
      %c0_17 = arith.constant 0 : index
      %c0_18 = arith.constant 0 : index
      %21 = vector.load %arg3[%c0_16, %c0_17, %c0_18] : memref<1x8x8xf32, #tpu.memory_space<vmem>>, vector<1x8x8xf32>
      tpu.vector_store %arg3[%c0_16, %c0_17, %c0_18], %20 {strides = array<i32>} : memref<1x8x8xf32, #tpu.memory_space<vmem>>, vector<1x8x8xf32>,
    } else {
    }
    return
  }
  func.func @transform_0(%arg0: i32, %arg1: i32) -> (i32, i32, i32) {
    %c0_i32 = arith.constant 0 : i32
    %c0_i32_0 = arith.constant 0 : i32
    return %arg0, %c0_i32, %arg1 : i32, i32, i32
  }
  func.func @transform_1(%arg0: i32, %arg1: i32) -> (i32, i32, i32) {
    %c0_i32 = arith.constant 0 : i32
    %c0_i32_0 = arith.constant 0 : i32
    %c0_i32_1 = arith.constant 0 : i32
    return %arg0, %c0_i32, %c0_i32_0 : i32, i32, i32
  }
}

</mosaic_0001>

<llo_original>
// kernel: tpu_custom_call.1
$region0: #{tpu_custom_call.1}
  #allocation0 [shape = 'u32[]', space=smem, size = 0x4, offset = 0x4, fixed_abs, tag = 'smem constant byte address 0x4 - core index']
  #allocation1 [shape = 'u32[72,128]{1,0:T(1,128)}', space=vmem, size = 0x9000, scoped, tag = 'internal scratch']
  #allocation2 [shape = 'f32[1,8,8]{2,1,0:T(8,128)}', space=vmem, size = 0x1000, scoped, tag = 'scratch operand']
  %s0 = inlined_call_operand.hbm [shape: f32[2,8,256], index: 0, kind: input, shape index: {}]
  %s1 = inlined_call_operand.hbm [shape: f32[2,8,8], index: 1, kind: output, shape index: {}]
  %s2 = sld [smem:[#allocation0]]
  $region49: #{tpu_custom_call.1} parent=0
    _
  %s4 = ssub.s32 1, %s2
  %s5 = scalar_select 0, %s4, %s2
  $region1: #{tpu_custom_call.1} parent=0
    #allocation3 [shape = 'u8[16384]{0}', space=vmem, size = 0x4000, scoped, tag = 'input window, operand 0']
    #allocation4 [shape = 's32[2]{0}', space=sflag, size = 0x8, scoped, tag = 'scoped memory for tpu_custom_call.1']
    #allocation5 [shape = 's32[2]{0}', space=sflag, size = 0x8, scoped, tag = 'scoped memory for tpu_custom_call.1']
    #allocation6 [shape = 'u8[8192]{0}', space=vmem, size = 0x2000, scoped, tag = 'output window, operand 0']
    %6 = vsyncpa [#allocation4], 0
    %s7 = scalar_lea.sflag [#allocation4], 1
    %8 = vsyncpa %s7, 0
    %9 = vsyncpa [#allocation5], 0
    %s10 = scalar_lea.sflag [#allocation5], 1
    %11 = vsyncpa %s10, 0
    loop: start=0, step=1, limit=4
    $region2: #{tpu_custom_call.1} parent=1 // loop_pre_header
      _
    $region3: #{tpu_custom_call.1} parent=1 // loop_header
      %s13 = sphi 0, %s17
      %p14 = scmp.ge.s32.totalorder %s13, 4
      %s20 = sphi 0, %s32
      %s21 = sphi 0, %s28
      %s22 = sphi 0, %s20
      %s23 = sphi 0, %s21
      %s24 = sphi 0, %s22
      %s25 = sphi 0, %s23
      %s37 = sphi 0, %s39
      %s40 = sphi 0, %s37
      %s41 = sphi 0, %s40
      %s57 = sphi 0, %s41
      %s63 = sphi 0, %s65
      %s66 = sphi 0, %s63
      %s67 = sphi 0, %s66
      %s83 = sphi 0, %s67
    $region4: #{tpu_custom_call.1} parent=1 // loop_header_branch
      %16 = sbr.rel (%p14) target = $region8
    $region5: #{tpu_custom_call.1} parent=1 // loop_body
      %s18 = ssub.s32 %s13, 1
      %s19 = ssub.s32 %s13, 2
      %s26 = sadd.s32 1, %s21
      %p27 = scmp.ge.s32.totalorder %s26, 1
      %s28 = scalar_select %p27, 0, %s26
      %s29 = sadd.s32 1, %s20
      %s30 = scalar_select %p27, %s29, %s20
      %p31 = scmp.ge.s32.totalorder %s30, 2
      %s32 = scalar_select %p31, 0, %s30
      %s33 = ssub.s32 %s20, %s32
      %s34 = ssub.s32 %s21, %s28
      %s35 = sor.u32 %s33, %s34
      %p36 = scmp.eq.s32.totalorder %s35, 0
      %s38 = sadd.s32 %s37, 1
      %s39 = scalar_select %p36, %s37, %s38
      %p42 = pneg %p36
      %p43 = scmp.eq.s32.totalorder %s13, 1
      %p44 = por %p42, %p43
      %p45 = scmp.ne.s32.totalorder %s37, %s40
      %p46 = scmp.eq.s32.totalorder %s13, 0
      %p47 = por %p45, %p46
      %p48 = scmp.ne.s32.totalorder %s37, %s40
      %p49 = scmp.eq.s32.totalorder %s18, 1
      %p50 = por %p48, %p49
      %p51 = scmp.ne.s32.totalorder %s40, %s41
      %p52 = scmp.eq.s32.totalorder %s18, 0
      %p53 = por %p51, %p52
      %p54 = scmp.ne.s32.totalorder %s40, %s41
      %p55 = scmp.eq.s32.totalorder %s19, 1
      %p56 = por %p54, %p55
      %p58 = scmp.ne.s32.totalorder %s41, %s57
      %p59 = scmp.eq.s32.totalorder %s19, 0
      %p60 = por %p58, %p59
      %s61 = ssub.s32 %s20, %s32
      %p62 = scmp.eq.s32.totalorder %s61, 0
      %s64 = sadd.s32 %s63, 1
      %s65 = scalar_select %p62, %s63, %s64
      %p68 = pneg %p62
      %p69 = scmp.eq.s32.totalorder %s13, 1
      %p70 = por %p68, %p69
      %p71 = scmp.ne.s32.totalorder %s63, %s66
      %p72 = scmp.eq.s32.totalorder %s13, 0
      %p73 = por %p71, %p72
      %p74 = scmp.ne.s32.totalorder %s63, %s66
      %p75 = scmp.eq.s32.totalorder %s18, 1
      %p76 = por %p74, %p75
      %p77 = scmp.ne.s32.totalorder %s66, %s67
      %p78 = scmp.eq.s32.totalorder %s18, 0
      %p79 = por %p77, %p78
      %p80 = scmp.ne.s32.totalorder %s66, %s67
      %p81 = scmp.eq.s32.totalorder %s19, 1
      %p82 = por %p80, %p81
      %p84 = scmp.ne.s32.totalorder %s67, %s83
      %p85 = scmp.eq.s32.totalorder %s19, 0
      %p86 = por %p84, %p85
      %p87 = scmp.le.s32.totalorder 1, %s13
      %p88 = scmp.lt.s32.totalorder %s13, 3
      %p89 = pnand %p87, %p88
      %p90 = pneg %p89
      // Predicated region
      $region9: #{tpu_custom_call.1} parent=5 // pred_check
        _
      $region10: #{tpu_custom_call.1} parent=5 // pred_check_branch
        %92 = sbr.rel (%p89) target = $region12
      $region11: #{tpu_custom_call.1} parent=5 // pred_region
        %s93 = ssub.s32 %s13, 1
      $region12: #{tpu_custom_call.1} parent=5 // pred_fallthru
        _
      %p94 = scmp.lt.s32.totalorder %s13, 2
      // Predicated region
      $region13: #{tpu_custom_call.1} parent=5 // pred_check
        %p95 = pneg %p94
      $region14: #{tpu_custom_call.1} parent=5 // pred_check_branch
        %97 = sbr.rel (%p95) target = $region16
      $region15: #{tpu_custom_call.1} parent=5 // pred_region
        // Predicated region
        $region17: #{tpu_custom_call.1} parent=15 // pred_check
          %p98 = pneg %p47
        $region18: #{tpu_custom_call.1} parent=15 // pred_check_branch
          %100 = sbr.rel (%p98) target = $region20
        $region19: #{tpu_custom_call.1} parent=15 // pred_region
          %s101 = sand.u32 %s37, 1
          %s102 = scalar_lea.sflag [#allocation4], %s101
          %s103 = sand.u32 %s37, 1
          %s104 = smul.addr %s103, 16
          %s105 = scalar_lea.vmem [#allocation3], %s104
          %s106 = smul.u32 2, %s21
          %108 = vsyncadd %s102, 0
          %s109 = smul.addr %s20, 2
          %s110 = sadd.s32 %s106, %s109
          %s111 = smul.addr %s110, 8
          %s112 = scalar_lea.hbm %s0, %s111
          %s114 = sshll.u32 %s112, 4
          %s115 = int_to_ptr.hbm [resolvable:$true] %s114
          %s116 = sshll.u32 %s105, 4
          %s117 = int_to_ptr.vmem [resolvable:$true] %s116
          %119 = dma.hbm_to_vmem [thread:$0]  %s115, 256, %s117, %s102
        $region20: #{tpu_custom_call.1} parent=15 // pred_fallthru
          _
      $region16: #{tpu_custom_call.1} parent=5 // pred_fallthru
        _
      %p120 = scmp.le.s32.totalorder 1, %s13
      %p121 = scmp.lt.s32.totalorder %s13, 3
      %p122 = pnand %p120, %p121
      %p123 = pneg %p122
      // Predicated region
      $region21: #{tpu_custom_call.1} parent=5 // pred_check
        _
      $region22: #{tpu_custom_call.1} parent=5 // pred_check_branch
        %125 = sbr.rel (%p122) target = $region24
      $region23: #{tpu_custom_call.1} parent=5 // pred_region
        %s126 = ssub.s32 %s13, 1
        %s127 = sand.u32 %s40, 1
        %s128 = scalar_lea.sflag [#allocation4], %s127
        %s129 = sand.u32 %s40, 1
        %s130 = smul.addr %s129, 16
        %s131 = scalar_lea.vmem [#allocation3], %s130
        // Predicated region
        $region25: #{tpu_custom_call.1} parent=23 // pred_check
          %p132 = pneg %p53
        $region26: #{tpu_custom_call.1} parent=23 // pred_check_branch
          %134 = sbr.rel (%p132) target = $region28
        $region27: #{tpu_custom_call.1} parent=23 // pred_region
          %136 = dma.done %s128, 256
        $region28: #{tpu_custom_call.1} parent=23 // pred_fallthru
          _
        %s137 = sand.u32 %s40, 1
        %s138 = scalar_lea.sflag [#allocation4], %s137
        %s139 = sand.u32 %s40, 1
        %s140 = smul.addr %s139, 16
        %s141 = scalar_lea.vmem [#allocation3], %s140
        %p142 = pneg %p53
        %p143 = pneg %p50
        %p144 = pneg %p79
        %p145 = pneg %p76
        %s146 = sand.u32 %s66, 1
        %s147 = scalar_lea.sflag [#allocation5], %s146
        %s148 = sand.u32 %s66, 1
        %s149 = smul.addr %s148, 8
        %s150 = scalar_lea.vmem [#allocation6], %s149
        %s151 = smul.u32 2, %s23
        %p152 = scmp.eq.s32.totalorder %s23, 0
        // Predicated region
        $region29: #{tpu_custom_call.1} parent=23 // pred_check
          %p153 = pneg %p152
        $region30: #{tpu_custom_call.1} parent=23 // pred_check_branch
          %155 = sbr.rel (%p153) target = $region32
        $region31: #{tpu_custom_call.1} parent=23 // pred_region
          %vm156 = vcmask 64512
          %157 = vst.msk [vmem:[#allocation2] sm:$0xff] %vm156, 0.0
        $region32: #{tpu_custom_call.1} parent=23 // pred_fallthru
          _
        %v158 = vld [vmem:[%s131] sm:$0xff]
        %v159 = vld [vmem:[%s131 + $0x8] sm:$0xff]
        %v160 = vld [vmem:[#allocation2] sm:$0xff]
        %161 = vmatpush.xpose.msra.mxu0 0.0
        %162 = vmatpush.xpose.msra.mxu0 0.0
        %163 = vmatpush.xpose.msra.mxu0 0.0
        %164 = vmatpush.xpose.msra.mxu0 0.0
        %165 = vmatpush.xpose.msra.mxu0 0.0
        %166 = vmatpush.xpose.msra.mxu0 0.0
        %167 = vmatpush.xpose.msra.mxu0 0.0
        %168 = vmatpush.xpose.msra.mxu0 0.0
        %169 = vmatpush.xpose.msra.mxu0 0.0
        %170 = vmatpush.xpose.msra.mxu0 0.0
        %171 = vmatpush.xpose.msra.mxu0 0.0
        %172 = vmatpush.xpose.msra.mxu0 0.0
        %173 = vmatpush.xpose.msra.mxu0 0.0
        %174 = vmatpush.xpose.msra.mxu0 0.0
        %175 = vmatpush.xpose.msra.mxu0 0.0
        %176 = vmatpush.xpose.msra.mxu0 %v158
        %177 = vmatmul.f32.gmra.mxu0 %v158
        %v178 = vpop.f32.mrf.mxu0
        %v179 = vadd.f32 0.0, %v178
        %180 = vdwg.mxu0
        %181 = vmatpush.xpose.msra.mxu0 0.0
        %182 = vmatpush.xpose.msra.mxu0 0.0
        %183 = vmatpush.xpose.msra.mxu0 0.0
        %184 = vmatpush.xpose.msra.mxu0 0.0
        %185 = vmatpush.xpose.msra.mxu0 0.0
        %186 = vmatpush.xpose.msra.mxu0 0.0
        %187 = vmatpush.xpose.msra.mxu0 0.0
        %188 = vmatpush.xpose.msra.mxu0 0.0
        %189 = vmatpush.xpose.msra.mxu0 0.0
        %190 = vmatpush.xpose.msra.mxu0 0.0
        %191 = vmatpush.xpose.msra.mxu0 0.0
        %192 = vmatpush.xpose.msra.mxu0 0.0
        %193 = vmatpush.xpose.msra.mxu0 0.0
        %194 = vmatpush.xpose.msra.mxu0 0.0
        %195 = vmatpush.xpose.msra.mxu0 0.0
        %196 = vmatpush.xpose.msra.mxu0 %v159
        %197 = vmatmul.f32.gmra.mxu0 %v159
        %v198 = vpop.f32.mrf.mxu0
        %v199 = vadd.f32 %v179, %v198
        %200 = vdwg.mxu0
        %v201 = vadd.f32 %v160, %v199
        %vm202 = vcmask 64512
        %203 = vst.msk [vmem:[#allocation2] sm:$0xff] %vm202, %v201
        // Predicated region
        $region33: #{tpu_custom_call.1} parent=23 // pred_check
          %p204 = pneg %p152
        $region34: #{tpu_custom_call.1} parent=23 // pred_check_branch
          %206 = sbr.rel (%p204) target = $region36
        $region35: #{tpu_custom_call.1} parent=23 // pred_region
          %v207 = vld [vmem:[#allocation2] sm:$0xff]
          %v208 = vsel %vm202, %v207, inf
          %209 = vmin.xlane.f32.xlu0 %v208
          %v210 = vpop.xlane.xlu0 %209
          %v211 = vsub.f32 %v210, %v207
          %v212 = vmul.f32 %v211, 1.442695
          %v213 = vpow.pop %v212
          %v214 = vsel %vm202, %v213, 0.0
          %215 = vadd.xlane.f32.xlu0 %v214
          %v216 = vpop.xlane.xlu0 %215
          %v217 = vrcp.pop %v216
          %v218 = vmul.f32 %v216, %v217
          %v219 = vsub.f32 1.0, %v218
          %v220 = vmul.f32 %v217, %v219
          %v221 = vadd.f32 %v217, %v220
          %vm222 = vweird.f32 %v216
          %vm223 = vweird.f32 %v217
          %vm224 = vmor %vm222, %vm223
          %v225 = vsel %vm224, %v217, %v221
          %v226 = vand.u32 2147483647, %v216
          %vm227 = vcmp.eq.f32.partialorder %v226, 8.507059e+37
          %v228 = vand.u32 %v216, 2147483648
          %v229 = vor.u32 1.1754944e-38, %v228
          %v230 = vsel %vm227, %v229, %v225
          %v231 = vmul.f32 %v213, %v230
          %232 = vst.msk [vmem:[%s150] sm:$0xff] %vm202, %v231
        $region36: #{tpu_custom_call.1} parent=23 // pred_fallthru
          _
        %s233 = sand.u32 %s66, 1
        %s234 = scalar_lea.sflag [#allocation5], %s233
        %s235 = sand.u32 %s66, 1
        %s236 = smul.addr %s235, 8
        %s237 = scalar_lea.vmem [#allocation6], %s236
        // Predicated region
        $region37: #{tpu_custom_call.1} parent=23 // pred_check
          %p238 = pneg %p76
        $region38: #{tpu_custom_call.1} parent=23 // pred_check_branch
          %240 = sbr.rel (%p238) target = $region40
        $region39: #{tpu_custom_call.1} parent=23 // pred_region
          %242 = vsyncadd %s234, 0
          %s243 = smul.addr %s22, 8
          %s244 = scalar_lea.hbm %s1, %s243
          %s246 = sshll.u32 %s237, 4
          %s247 = int_to_ptr.vmem [resolvable:$true] %s246
          %s248 = sshll.u32 %s244, 4
          %s249 = int_to_ptr.hbm [resolvable:$true] %s248
          %251 = dma.vmem_to_hbm [thread:$0]  %s247, 128, %s249, %s234
        $region40: #{tpu_custom_call.1} parent=23 // pred_fallthru
          _
      $region24: #{tpu_custom_call.1} parent=5 // pred_fallthru
        _
      %p252 = scmp.le.s32.totalorder 2, %s13
      // Predicated region
      $region41: #{tpu_custom_call.1} parent=5 // pred_check
        %p253 = pneg %p252
      $region42: #{tpu_custom_call.1} parent=5 // pred_check_branch
        %255 = sbr.rel (%p253) target = $region44
      $region43: #{tpu_custom_call.1} parent=5 // pred_region
        %s256 = ssub.s32 %s13, 2
        // Predicated region
        $region45: #{tpu_custom_call.1} parent=43 // pred_check
          %p257 = pneg %p82
        $region46: #{tpu_custom_call.1} parent=43 // pred_check_branch
          %259 = sbr.rel (%p257) target = $region48
        $region47: #{tpu_custom_call.1} parent=43 // pred_region
          %s260 = sand.u32 %s67, 1
          %s261 = scalar_lea.sflag [#allocation5], %s260
          %s262 = sand.u32 %s67, 1
          %s263 = smul.addr %s262, 8
          %s264 = scalar_lea.vmem [#allocation6], %s263
          %266 = dma.done %s261, 128
        $region48: #{tpu_custom_call.1} parent=43 // pred_fallthru
          _
      $region44: #{tpu_custom_call.1} parent=5 // pred_fallthru
        _
    $region6: #{tpu_custom_call.1} parent=1 // loop_footer
      %s17 = sadd.s32 1, %s13
    $region7: #{tpu_custom_call.1} parent=1 // loop_footer_branch
      %12 = sbr.rel target = $region3
    $region8: #{tpu_custom_call.1} parent=1 // loop_exit
      _
    %267 = vsyncpa [#allocation4], 1
    %s268 = scalar_lea.sflag [#allocation4], 1
    %269 = vsyncpa %s268, 1
    %270 = vsyncpa [#allocation5], 1
    %s271 = scalar_lea.sflag [#allocation5], 1
    %272 = vsyncpa %s271, 1

</llo_original>
